<compile_context>
chip_gen: v6e
topology: v6e:2x2x1
jax: 0.10.0
libtpu: 0.0.40
codegen_flags: <defaults>
</compile_context>

<pallas_src>
import math

import jax
import jax.numpy as jnp
from jax.experimental import pallas as pl
from jax.experimental.pallas import tpu as pltpu

_VMEM_INPUT_BUDGET = 8 * 1024 * 1024  # bytes for the double-buffered input tile


def _pick_tile_n(n, d, itemsize, requested=None):
    """Rows per tile: multiple of 8, <= row count, double-buffered tile fits budget."""
    if n <= 8:
        return n
    max_rows = max(8, (_VMEM_INPUT_BUDGET // (2 * d * itemsize)) // 8 * 8)
    t = requested if requested is not None else min(1024, max_rows)
    t = max(8, min(int(t), max_rows)) // 8 * 8
    return min(t, (n // 8) * 8)


def _make_kernel(n_rows, tile_n):
    def kernel(bt_ref, contrib_ref):
        x = bt_ref[...].astype(jnp.float32)                 # [tile_n, D]
        d = x.shape[1]
        inv_d = jnp.float32(1.0 / d)
        log_rho = jnp.float32(math.log(1.0 / d))

        m = jnp.max(x, axis=1, keepdims=True)               # [tile_n, 1]
        s = jnp.sum(x, axis=1, keepdims=True)                # [tile_n, 1]
        lse = jnp.log(jnp.sum(jnp.exp(x - m), axis=1, keepdims=True))

        # per-row:  sum_d rho * (log_rho - log_softmax)  ==  log_rho - s/D + m + lse
        contrib = log_rho - s * inv_d + (m + lse)

        # zero rows past the end of the batch (ragged final tile reads padding)
        row_ids = pl.program_id(0) * tile_n + jax.lax.broadcasted_iota(
            jnp.int32, (tile_n, 1), 0)
        contrib_ref[...] = jnp.where(row_ids < n_rows, contrib, 0.0)

    return kernel


def sparse_kl_divergence_loss(bt: jax.Array, *, tile_n: int | None = None) -> jax.Array:
    """Pallas TPU implementation of Sparse_KL_DivergenceLoss.forward (default flags)."""
    assert bt.ndim == 2, "bottleneck input must be [N, D]"
    n, d = bt.shape
    itemsize = jnp.dtype(bt.dtype).itemsize
    tile_n = _pick_tile_n(n, d, itemsize, tile_n)
    num_tiles = pl.cdiv(n, tile_n)

    contribs = pl.pallas_call(
        _make_kernel(n, tile_n),
        out_shape=jax.ShapeDtypeStruct((n, 1), jnp.float32),
        grid=(num_tiles,),
        in_specs=[pl.BlockSpec((tile_n, d), lambda i: (i, 0))],
        out_specs=pl.BlockSpec((tile_n, 1), lambda i: (i, 0)),
        compiler_params=pltpu.CompilerParams(
            dimension_semantics=("parallel",),
        ),
        cost_estimate=pl.CostEstimate(
            flops=4 * n * d,                       # sub, reductions, per-row fixups
            transcendentals=n * d + n,             # exp per element + log per row
            bytes_accessed=n * d * itemsize + n * 4,
        ),
    )(bt)

    # 'batchmean' reduction: total sum over all elements / batch size.
    return jnp.sum(contribs) / jnp.float32(n)


def _reference(bt: jax.Array) -> jax.Array:
    # Pure-JAX reference mirroring the PyTorch semantics (default flags).
    n, d = bt.shape
    rho = 1.0 / d
    log_sm = jax.nn.log_softmax(bt.astype(jnp.float32), axis=1)
    pointwise = rho * (jnp.log(jnp.float32(rho)) - log_sm)
    return jnp.sum(pointwise) / n


if __name__ == "__main__":
    key = jax.random.PRNGKey(0)
    k1, k2, k3 = jax.random.split(key, 3)

    cases = [
        # (input, forced tile_n)
        (jax.random.normal(k1, (8, 32), dtype=jnp.float32), None),        # single tile
        (2.0 * jax.random.normal(k2, (50, 32), dtype=jnp.float32), 16),   # multi-tile + ragged edge
        (jax.random.normal(k3, (8, 32), dtype=jnp.bfloat16), None),       # native bf16 input
    ]

    for bt, tn in cases:
        got = jax.block_until_ready(sparse_kl_divergence_loss(bt, tile_n=tn))
        ref = jax.block_until_ready(_reference(bt))
        assert jnp.allclose(got, ref, rtol=1e-5, atol=1e-5), (bt.shape, bt.dtype, got, ref)

    print("KERNEL_OK")
</pallas_src>

<mosaic_0001>
module attributes {stable_mosaic.version = 11 : i64} {
  func.func @kernel(%arg0: i32, %arg1: memref<8x32xf32, #tpu.memory_space<vmem>>, %arg2: memref<8x1xf32, #tpu.memory_space<vmem>>) attributes {dimension_semantics = [#tpu.dimension_semantics<parallel>], iteration_bounds = array<i64: 1>, scalar_prefetch = 0 : i64, scratch_operands = 0 : i64, tpu.core_type = #tpu.core_type<tc>, window_params = [{transform_indices = @transform_0, window_bounds = array<i64: 8, 32>}, {transform_indices = @transform_1, window_bounds = array<i64: 8, 1>}]} {
    %c0 = arith.constant 0 : index
    %c0_0 = arith.constant 0 : index
    %0 = vector.load %arg1[%c0, %c0_0] : memref<8x32xf32, #tpu.memory_space<vmem>>, vector<8x32xf32>
    %cst = arith.constant dense<0xFF800000> : vector<8xf32>
    %1 = vector.multi_reduction <maximumf>, %0, %cst [1] : vector<8x32xf32> to vector<8xf32>
    %2 = vector.shape_cast %1 : vector<8xf32> to vector<8x1xf32>
    %cst_1 = arith.constant dense<0.000000e+00> : vector<8xf32>
    %3 = vector.multi_reduction <add>, %0, %cst_1 [1] : vector<8x32xf32> to vector<8xf32>
    %4 = vector.shape_cast %3 : vector<8xf32> to vector<8x1xf32>
    %5 = vector.broadcast %2 : vector<8x1xf32> to vector<8x32xf32>
    %6 = arith.subf %0, %5 : vector<8x32xf32>
    %7 = math.exp %6 : vector<8x32xf32>
    %cst_2 = arith.constant dense<0.000000e+00> : vector<8xf32>
    %8 = vector.multi_reduction <add>, %7, %cst_2 [1] : vector<8x32xf32> to vector<8xf32>
    %9 = vector.shape_cast %8 : vector<8xf32> to vector<8x1xf32>
    %10 = math.log %9 : vector<8x1xf32>
    %cst_3 = arith.constant 3.125000e-02 : f32
    %11 = vector.broadcast %cst_3 : f32 to vector<8x1xf32>
    %12 = arith.mulf %4, %11 : vector<8x1xf32>
    %cst_4 = arith.constant -3.46573591 : f32
    %13 = vector.broadcast %cst_4 : f32 to vector<8x1xf32>
    %14 = arith.subf %13, %12 : vector<8x1xf32>
    %15 = arith.addf %2, %10 : vector<8x1xf32>
    %16 = arith.addf %14, %15 : vector<8x1xf32>
    %c8_i32 = arith.constant 8 : i32
    %17 = arith.muli %arg0, %c8_i32 : i32
    %18 = tpu.iota {dimensions = array<i32: 0>} : vector<8x1xi32>
    %19 = vector.broadcast %17 : i32 to vector<8x1xi32>
    %20 = arith.addi %19, %18 : vector<8x1xi32>
    %c8_i32_5 = arith.constant 8 : i32
    %21 = vector.broadcast %c8_i32_5 : i32 to vector<8x1xi32>
    %22 = arith.cmpi slt, %20, %21 : vector<8x1xi32>
    %cst_6 = arith.constant 0.000000e+00 : f32
    %23 = vector.broadcast %cst_6 : f32 to vector<8x1xf32>
    %24 = arith.select %22, %16, %23 : vector<8x1xi1>, vector<8x1xf32>
    %c0_7 = arith.constant 0 : index
    %c0_8 = arith.constant 0 : index
    %25 = vector.load %arg2[%c0_7, %c0_8] : memref<8x1xf32, #tpu.memory_space<vmem>>, vector<8x1xf32>
    tpu.vector_store %arg2[%c0_7, %c0_8], %24 {strides = array<i32>} : memref<8x1xf32, #tpu.memory_space<vmem>>, vector<8x1xf32>,
    return
  }
  func.func @transform_0(%arg0: i32) -> (i32, i32) {
    %c0_i32 = arith.constant 0 : i32
    %c0_i32_0 = arith.constant 0 : i32
    return %arg0, %c0_i32 : i32, i32
  }
  func.func @transform_1(%arg0: i32) -> (i32, i32) {
    %c0_i32 = arith.constant 0 : i32
    %c0_i32_0 = arith.constant 0 : i32
    return %arg0, %c0_i32 : i32, i32
  }
}

</mosaic_0001>

<llo_original>
// kernel: tpu_custom_call.1
$region0: #{tpu_custom_call.1}
  #allocation0 [shape = 'u32[]', space=smem, size = 0x4, offset = 0x4, fixed_abs, tag = 'smem constant byte address 0x4 - core index']
  #allocation1 [shape = 'u32[144,128]{1,0:T(1,128)}', space=vmem, size = 0x12000, scoped, tag = 'internal scratch']
  %s0 = inlined_call_operand.hbm [shape: f32[8,32], index: 0, kind: input, shape index: {}]
  %s1 = inlined_call_operand.vmem [shape: f32[8,1], index: 1, kind: output, shape index: {}]
  %s2 = sld [smem:[#allocation0]]
  $region18: #{tpu_custom_call.1} parent=0
    _
  %s4 = ssub.s32 1, %s2
  %s5 = scalar_select 0, %s4, %s2
  $region1: #{tpu_custom_call.1} parent=0
    #allocation2 [shape = 'u8[4096]{0}', space=vmem, size = 0x1000, scoped, tag = 'input window, operand 0, single buffered']
    #allocation3 [shape = 's32[1]{0}', space=sflag, size = 0x4, scoped, tag = 'scoped memory for tpu_custom_call.1']
    %6 = vsyncpa [#allocation3], 0
    // Predicated region
    $region2: #{tpu_custom_call.1} parent=1 // pred_check
      _
    $region3: #{tpu_custom_call.1} parent=1 // pred_check_branch
      %8 = sbr.rel (0) target = $region5
    $region4: #{tpu_custom_call.1} parent=1 // pred_region
      %s10 = ssub.s32 128, 128
      %11 = vsyncadd [#allocation3], %s10
      %s13 = sshll.u32 [#allocation2], 4
      %s14 = int_to_ptr.vmem [resolvable:$true] %s13
      %16 = dma.hbm_to_vmem [thread:$0]  %s0, 128, %s14, [#allocation3]
    $region5: #{tpu_custom_call.1} parent=1 // pred_fallthru
      _
    // Predicated region
    $region6: #{tpu_custom_call.1} parent=1 // pred_check
      _
    $region7: #{tpu_custom_call.1} parent=1 // pred_check_branch
      %18 = sbr.rel (0) target = $region9
    $region8: #{tpu_custom_call.1} parent=1 // pred_region
      %19 = dma.done [#allocation3], 128
    $region9: #{tpu_custom_call.1} parent=1 // pred_fallthru
      _
    %v20 = vld [vmem:[#allocation2] sm:$0xff]
    %vm21 = vcmask 261120
    %v22 = vsel %vm21, %v20, -inf
    %23 = vmax.xlane.f32.xlu0 %v22
    %v24 = vpop.xlane.xlu0 %23
    %v25 = vsel %vm21, %v20, 0.0
    %26 = vadd.xlane.f32.xlu0 %v25
    %v27 = vpop.xlane.xlu0 %26
    %v28 = vsub.f32 %v20, %v24
    %v29 = vmul.f32 %v28, 1.442695
    %v30 = vpow.pop %v29
    %v31 = vsel %vm21, %v30, 0.0
    %32 = vadd.xlane.f32.xlu0 %v31
    %v33 = vpop.xlane.xlu0 %32
    %v34 = vlog2.pop %v33
    %v35 = vmul.f32 %v34, 0.6931472
    %v36 = vmul.f32 %v27, 0.03125
    %v37 = vsub.f32 -3.465736, %v36
    %v38 = vadd.f32 %v24, %v35
    %v39 = vadd.f32 %v37, %v38
    %s40 = smul.u32 0, 8
    %v41 = vlaneseq
    %v42 = vshrl.u32 %v41, 7
    %v43 = vstv %s40
    %v44 = vadd.s32 %v43, %v42
    %vm45 = vcmp.lt.s32.totalorder %v44, 8
    %v46 = vsel %vm45, %v39, 0.0
    %vm47 = vcmask 7168
    %48 = vst.msk [vmem:[%s1] sm:$0xff] %vm47, %v46
    // Predicated region
    $region10: #{tpu_custom_call.1} parent=1 // pred_check
      _
    $region11: #{tpu_custom_call.1} parent=1 // pred_check_branch
      %50 = sbr.rel (0) target = $region13
    $region12: #{tpu_custom_call.1} parent=1 // pred_region
      _
    $region13: #{tpu_custom_call.1} parent=1 // pred_fallthru
      _
    // Predicated region
    $region14: #{tpu_custom_call.1} parent=1 // pred_check
      _
    $region15: #{tpu_custom_call.1} parent=1 // pred_check_branch
      %52 = sbr.rel (0) target = $region17
    $region16: #{tpu_custom_call.1} parent=1 // pred_region
      _
    $region17: #{tpu_custom_call.1} parent=1 // pred_fallthru
      _
    %53 = vsyncpa [#allocation3], 1

</llo_original>
